<compile_context>
chip_gen: v7x
topology: tpu7x:2x2x1
jax: 0.10.0
libtpu: 0.0.40
codegen_flags: <defaults>
</compile_context>

<pallas_src>
import jax
import jax.numpy as jnp
from jax.experimental import pallas as pl
from jax.experimental.pallas import tpu as pltpu

LANE = 128           # feature dims padded to 128 lanes (dense vregs, unmasked vst)
SUBLANE_BF16 = 16    # batch tiles are multiples of 16 (bf16 sublane packing)


def _round_up(n, m):
    return (n + m - 1) // m * m


def _vmem_capacity_bytes():
    """Physical per-core VMEM (v5e/v6e: 128 MiB, v7x: 64 MiB); conservative fallback."""
    try:
        return int(pltpu.get_tpu_info().vmem_capacity_bytes)
    except Exception:
        return 64 * 1024 * 1024


def _fused_footprint(tb, in_p, enc_p, out_p, x_bytes, out_bytes, single_w):
    """Approximate VMEM bytes for the fully weight-resident (no K-tiling) path."""
    wbuf = 1 if single_w else 2
    fp = 2 * tb * in_p * x_bytes                        # x tiles (double-buffered)
    fp += 2 * tb * out_p * out_bytes                    # output tiles (double-buffered)
    fp += wbuf * (in_p * enc_p + enc_p * out_p) * 2     # resident bf16 weights
    fp += wbuf * (enc_p + out_p) * 4                    # resident f32 biases
    fp += tb * (in_p * 2 + enc_p * 6 + out_p * 4)       # bf16 x, f32 h, bf16 h, f32 y
    return fp


def _ktiled_footprint(tb, tk, enc_p, out_p, x_bytes, out_bytes, single_w):
    """Approximate VMEM bytes for the K-tiled (input_dim-sliced) path."""
    wbuf = 1 if single_w else 2
    fp = 2 * tb * tk * x_bytes                          # x K-slab tiles
    fp += 2 * tb * out_p * out_bytes                    # output tiles
    fp += 2 * tk * enc_p * 2                            # W1 K-slabs (streamed, 2-buf)
    fp += wbuf * enc_p * out_p * 2                      # resident bf16 W2
    fp += wbuf * (enc_p + out_p) * 4                    # resident f32 biases
    fp += tb * enc_p * 4                                # f32 accumulator scratch
    fp += tb * (tk * 2 + enc_p * 2 + out_p * 4)         # bf16 x, bf16 h, f32 y
    return fp


# ---------------------------------------------------------------------------
# Kernels
# ---------------------------------------------------------------------------

def _fused_kernel(x_ref, w1_ref, b1_ref, w2_ref, b2_ref, o_ref):
    # Encoder: cast the f32 x tile to bf16 in-VMEM and matmul with resident bf16 W1,
    # accumulating in f32 on the MXU; bias + ReLU stay in f32 (v5e VPU has no bf16).
    h = jnp.dot(x_ref[...].astype(jnp.bfloat16), w1_ref[...],
                preferred_element_type=jnp.float32)
    h = jnp.maximum(h + b1_ref[...], 0.0)
    # Decoder: re-feed the MXU in bf16, accumulate in f32.
    y = jnp.dot(h.astype(jnp.bfloat16), w2_ref[...],
                preferred_element_type=jnp.float32)
    o_ref[...] = jnp.maximum(y + b2_ref[...], 0.0).astype(o_ref.dtype)


def _ktiled_kernel(x_ref, w1_ref, b1_ref, w2_ref, b2_ref, o_ref, acc_ref):
    # Grid = (batch tiles, K tiles).  Encoder accumulates over K in an f32 scratch;
    # bias/ReLU/decoder run once, on the last K step (P3 init/finalize pattern).
    k = pl.program_id(1)

    @pl.when(k == 0)
    def _init():
        acc_ref[...] = jnp.zeros_like(acc_ref)

    acc_ref[...] += jnp.dot(x_ref[...].astype(jnp.bfloat16), w1_ref[...],
                            preferred_element_type=jnp.float32)

    @pl.when(k == pl.num_programs(1) - 1)
    def _finalize():
        h = jnp.maximum(acc_ref[...] + b1_ref[...], 0.0)
        y = jnp.dot(h.astype(jnp.bfloat16), w2_ref[...],
                    preferred_element_type=jnp.float32)
        o_ref[...] = jnp.maximum(y + b2_ref[...], 0.0).astype(o_ref.dtype)


# ---------------------------------------------------------------------------
# Host-side wrappers
# ---------------------------------------------------------------------------

def prepare_autoencoder_params(w1, b1, w2, b2):
    """Pad feature dims to 128-lane multiples and cast MXU operands to bf16.

    Call ONCE (e.g. at model init) and reuse across forward calls -- avoids
    re-padding / re-casting the weights (a full weight-sized HBM pass) per call.
    w1: (input_dim, encoding_dim)  [already transposed vs. PyTorch's (out, in)]
    w2: (encoding_dim, out_dim)
    """
    input_dim, enc = w1.shape
    enc2, out_dim = w2.shape
    assert enc == enc2 and b1.shape == (enc,) and b2.shape == (out_dim,)
    in_p, enc_p, out_p = (_round_up(d, LANE) for d in (input_dim, enc, out_dim))
    # TODO(synk): on v6e/v7x consider 256-aligned contraction dims (256x256 MXU);
    # 128-alignment is kept because it is optimal on v5e and never wrong.
    w1_p = jnp.pad(w1.astype(jnp.bfloat16),
                   ((0, in_p - input_dim), (0, enc_p - enc)))
    w2_p = jnp.pad(w2.astype(jnp.bfloat16),
                   ((0, enc_p - enc), (0, out_p - out_dim)))
    b1_p = jnp.pad(b1.astype(jnp.float32), (0, enc_p - enc)).reshape(1, enc_p)
    b2_p = jnp.pad(b2.astype(jnp.float32), (0, out_p - out_dim)).reshape(1, out_p)
    return dict(w1=w1_p, b1=b1_p, w2=w2_p, b2=b2_p,
                input_dim=input_dim, encoding_dim=enc, out_dim=out_dim)


def autoencoder_forward(x, params, *, tb=None, vmem_budget_bytes=None,
                        force_ktiled=False):
    """Fused autoencoder forward:  relu(relu(x @ W1 + b1) @ W2 + b2).

    x      : (B, input_dim), float (fed to the MXU as bf16, accumulated in f32).
    params : output of prepare_autoencoder_params().
    Returns (B, out_dim) in x.dtype.
    """
    B, input_dim = x.shape
    assert input_dim == params["input_dim"], "x feature dim mismatch"
    out_dim = params["out_dim"]
    out_dtype = x.dtype
    x_bytes = x.dtype.itemsize
    out_bytes = out_dtype.itemsize

    w1_p, b1_p, w2_p, b2_p = params["w1"], params["b1"], params["w2"], params["b2"]
    in_p, enc_p = w1_p.shape
    out_p = w2_p.shape[1]

    # ---------------- tile / VMEM planning ----------------
    cap = _vmem_capacity_bytes()
    budget = int(0.75 * cap) if vmem_budget_bytes is None else int(vmem_budget_bytes)

    if tb is None:
        if B < 32:
            tb = _round_up(max(B, 1), SUBLANE_BF16)
        elif B < 512:
            # >= ~4 grid steps: shards across both v7x TensorCores and lets the
            # x DMA / output writeback overlap compute on every generation.
            tb = max(SUBLANE_BF16, _round_up(pl.cdiv(B, 4), SUBLANE_BF16))
        else:
            # Pick the tile minimizing batch-padding waste (ties -> bigger tile).
            tb = min((512, 384, 256, 128),
                     key=lambda c: (_round_up(B, c) - B, -c))
    tb = max(SUBLANE_BF16, _round_up(int(tb), SUBLANE_BF16))

    # Shrink tb if even the most aggressively K-tiled config cannot fit the budget
    # (per-tile intermediates h / y scale with tb * enc_p).
    while (tb > SUBLANE_BF16
           and _fused_footprint(tb, in_p, enc_p, out_p, x_bytes, out_bytes, True)
               > budget
           and _ktiled_footprint(tb, LANE, enc_p, out_p, x_bytes, out_bytes, True)
               > budget):
        tb = max(SUBLANE_BF16, _round_up(tb // 2, SUBLANE_BF16))

    use_ktiled = force_ktiled or (
        _fused_footprint(tb, in_p, enc_p, out_p, x_bytes, out_bytes, True) > budget)

    if use_ktiled:
        # Split input_dim into n_k slabs of tk (128-lane multiples) so the streamed
        # W1 K-slabs + resident W2 + f32 accumulator fit the budget.
        # TODO(synk): also tile the decoder (enc/out) axes when enc_p*out_p alone
        # exceeds the budget.
        n_k = 2
        while True:
            tk = _round_up(pl.cdiv(in_p, n_k), LANE)
            if tk == LANE or _ktiled_footprint(
                    tb, tk, enc_p, out_p, x_bytes, out_bytes, True) <= budget:
                break
            n_k += 1
        in_pp = tk * n_k
    else:
        n_k, tk, in_pp = 1, in_p, in_p

    Bp = _round_up(B, tb)

    # ---------------- wrapper-side data movement (minimal) ----------------
    # x stays f32 (bf16 cast happens inside the kernel); pad only if needed so the
    # aligned case reads x straight from HBM with no extra pass.
    x_p = x
    if Bp != B or in_pp != input_dim:
        x_p = jnp.pad(x, ((0, Bp - B), (0, in_pp - input_dim)))
    w1_use = w1_p if in_pp == in_p else jnp.pad(w1_p, ((0, in_pp - in_p), (0, 0)))

    flops = 2 * Bp * (in_pp * enc_p + enc_p * out_p)
    bytes_accessed = int(x_p.size * x_bytes + w1_use.size * 2 + w2_p.size * 2
                         + b1_p.size * 4 + b2_p.size * 4 + Bp * out_p * out_bytes)
    cost = pl.CostEstimate(flops=int(flops), transcendentals=0,
                           bytes_accessed=bytes_accessed)

    def _vmem_limit(single_w):
        if use_ktiled:
            fp = _ktiled_footprint(tb, tk, enc_p, out_p, x_bytes, out_bytes, single_w)
        else:
            fp = _fused_footprint(tb, in_pp, enc_p, out_p, x_bytes, out_bytes, single_w)
        # Headroom for Mosaic internal scratch / semaphores; never request the whole
        # physical VMEM (v7x only has 64 MiB).
        return int(min(max(fp + (8 << 20), 32 << 20), int(0.9 * cap)))

    def build_fused(single_w):
        def resident(shape):
            if single_w:
                return pl.BlockSpec(shape, lambda i: (0, 0),
                                    pipeline_mode=pl.Buffered(1))
            return pl.BlockSpec(shape, lambda i: (0, 0))

        return pl.pallas_call(
            _fused_kernel,
            out_shape=jax.ShapeDtypeStruct((Bp, out_p), out_dtype),
            grid_spec=pltpu.PrefetchScalarGridSpec(
                num_scalar_prefetch=0,
                grid=(Bp // tb,),
                in_specs=[
                    pl.BlockSpec((tb, in_pp), lambda i: (i, 0)),  # x streams over batch
                    resident((in_pp, enc_p)),   # W1 (weight-stationary)
                    resident((1, enc_p)),       # b1
                    resident((enc_p, out_p)),   # W2
                    resident((1, out_p)),       # b2
                ],
                out_specs=pl.BlockSpec((tb, out_p), lambda i: (i, 0)),
            ),
            compiler_params=pltpu.CompilerParams(
                dimension_semantics=("parallel",),
                vmem_limit_bytes=_vmem_limit(single_w)),
            cost_estimate=cost,
        )

    def build_ktiled(single_w):
        def resident(shape):
            if single_w:
                return pl.BlockSpec(shape, lambda i, k: (0, 0),
                                    pipeline_mode=pl.Buffered(1))
            return pl.BlockSpec(shape, lambda i, k: (0, 0))

        return pl.pallas_call(
            _ktiled_kernel,
            out_shape=jax.ShapeDtypeStruct((Bp, out_p), out_dtype),
            grid_spec=pltpu.PrefetchScalarGridSpec(
                num_scalar_prefetch=0,
                grid=(Bp // tb, n_k),
                in_specs=[
                    pl.BlockSpec((tb, tk), lambda i, k: (i, k)),     # x K-slab
                    pl.BlockSpec((tk, enc_p), lambda i, k: (k, 0)),  # W1 K-slab (streamed)
                    resident((1, enc_p)),       # b1
                    resident((enc_p, out_p)),   # W2 (resident)
                    resident((1, out_p)),       # b2
                ],
                out_specs=pl.BlockSpec((tb, out_p), lambda i, k: (i, 0)),
                scratch_shapes=[pltpu.VMEM((tb, enc_p), jnp.float32)],
            ),
            compiler_params=pltpu.CompilerParams(
                dimension_semantics=("parallel", "arbitrary"),
                vmem_limit_bytes=_vmem_limit(single_w)),
            cost_estimate=cost,
        )

    builder = build_ktiled if use_ktiled else build_fused
    args = (x_p, w1_use, b1_p, w2_p, b2_p)
    try:
        out = builder(True)(*args)    # single-buffered resident weights (preferred)
    except Exception:
        out = builder(False)(*args)   # fallback: default double-buffering

    # Strip batch / lane padding.
    return out[:B, :out_dim]


def init_linear_params(key, in_features, out_features, dtype=jnp.float32):
    """PyTorch nn.Linear default init (uniform +/- 1/sqrt(fan_in)); weight returned
    already transposed to (in, out)."""
    kw, kb = jax.random.split(key)
    bound = 1.0 / float(in_features) ** 0.5
    w = jax.random.uniform(kw, (in_features, out_features), dtype,
                           minval=-bound, maxval=bound)
    b = jax.random.uniform(kb, (out_features,), dtype,
                           minval=-bound, maxval=bound)
    return w, b


if __name__ == "__main__":
    encoding_dim = 256

    def run_and_check(x, w1, b1, w2, b2, **kw):
        params = prepare_autoencoder_params(w1, b1, w2, b2)
        y = jax.block_until_ready(autoencoder_forward(x, params, **kw))
        assert y.shape == (x.shape[0], w2.shape[1])
        # Reference matching the kernel's bf16 MXU feed / f32 accumulation.
        xb = x.astype(jnp.bfloat16).astype(jnp.float32)
        w1b = w1.astype(jnp.bfloat16).astype(jnp.float32)
        w2b = w2.astype(jnp.bfloat16).astype(jnp.float32)
        h = jnp.maximum(xb @ w1b + b1, 0.0).astype(jnp.bfloat16).astype(jnp.float32)
        ref_bf16 = jnp.maximum(h @ w2b + b2, 0.0)
        assert jnp.allclose(y, ref_bf16, atol=2e-2, rtol=2e-2)
        # Full-f32 PyTorch-equivalent reference (loose tol due to bf16 MXU feed).
        ref_f32 = jnp.maximum(jnp.maximum(x @ w1 + b1, 0.0) @ w2 + b2, 0.0)
        assert jnp.allclose(y, ref_f32, atol=0.2, rtol=0.2)
        return y

    key = jax.random.PRNGKey(0)
    kx1, kw1, kw2, kx2, kw3, kw4 = jax.random.split(key, 6)

    # Case 1: aligned small shapes, Autoencoder(input_dim=128, 256, out_dim=128).
    batch, input_dim, out_dim = 8, 128, 128
    x1 = jax.random.normal(kx1, (batch, input_dim), jnp.float32)
    w1a, b1a = init_linear_params(kw1, input_dim, encoding_dim)
    w2a, b2a = init_linear_params(kw2, encoding_dim, out_dim)
    run_and_check(x1, w1a, b1a, w2a, b2a)

    # Case 2: unaligned dims + ragged batch, exercising lane/batch padding and the
    # K-tiled ('arbitrary' reduction axis + f32 accumulator) fallback path.
    batch2, in2, out2 = 37, 200, 96
    x2 = jax.random.normal(kx2, (batch2, in2), jnp.float32)
    w1c, b1c = init_linear_params(kw3, in2, encoding_dim)
    w2c, b2c = init_linear_params(kw4, encoding_dim, out2)
    run_and_check(x2, w1c, b1c, w2c, b2c, force_ktiled=True)

    print("KERNEL_OK")
</pallas_src>

<mosaic_0001>
module attributes {stable_mosaic.version = 11 : i64} {
  func.func @_fused_kernel(%arg0: i32, %arg1: memref<16x128xf32, #tpu.memory_space<vmem>>, %arg2: memref<128x256xbf16, #tpu.memory_space<vmem>>, %arg3: memref<1x256xf32, #tpu.memory_space<vmem>>, %arg4: memref<256x128xbf16, #tpu.memory_space<vmem>>, %arg5: memref<1x128xf32, #tpu.memory_space<vmem>>, %arg6: memref<16x128xf32, #tpu.memory_space<vmem>>) attributes {dimension_semantics = [#tpu.dimension_semantics<parallel>], iteration_bounds = array<i64: 1>, scalar_prefetch = 0 : i64, scratch_operands = 0 : i64, tpu.core_type = #tpu.core_type<tc>, window_params = [{transform_indices = @transform_0, window_bounds = array<i64: 16, 128>}, {pipeline_mode = #tpu.pipeline_mode<synchronous>, transform_indices = @transform_1, window_bounds = array<i64: 128, 256>}, {pipeline_mode = #tpu.pipeline_mode<synchronous>, transform_indices = @transform_2, window_bounds = array<i64: 1, 256>}, {pipeline_mode = #tpu.pipeline_mode<synchronous>, transform_indices = @transform_3, window_bounds = array<i64: 256, 128>}, {pipeline_mode = #tpu.pipeline_mode<synchronous>, transform_indices = @transform_4, window_bounds = array<i64: 1, 128>}, {transform_indices = @transform_5, window_bounds = array<i64: 16, 128>}]} {
    %c0 = arith.constant 0 : index
    %c0_0 = arith.constant 0 : index
    %0 = vector.load %arg1[%c0, %c0_0] : memref<16x128xf32, #tpu.memory_space<vmem>>, vector<16x128xf32>
    %1 = arith.truncf %0 : vector<16x128xf32> to vector<16x128xbf16>
    %c0_1 = arith.constant 0 : index
    %c0_2 = arith.constant 0 : index
    %2 = vector.load %arg2[%c0_1, %c0_2] : memref<128x256xbf16, #tpu.memory_space<vmem>>, vector<128x256xbf16>
    %cst = arith.constant dense<0.000000e+00> : vector<16x256xf32>
    %3 = tpu.matmul %1, %2, %cst {dimension_numbers = #tpu.dot_dimension_numbers<[1], [0], [0], [1], [0, 0, 1, 1], [], []>} : vector<16x128xbf16>, vector<128x256xbf16>, vector<16x256xf32> -> vector<16x256xf32>
    %c0_3 = arith.constant 0 : index
    %c0_4 = arith.constant 0 : index
    %4 = vector.load %arg3[%c0_3, %c0_4] : memref<1x256xf32, #tpu.memory_space<vmem>>, vector<1x256xf32>
    %5 = vector.broadcast %4 : vector<1x256xf32> to vector<16x256xf32>
    %6 = arith.addf %3, %5 : vector<16x256xf32>
    %cst_5 = arith.constant 0.000000e+00 : f32
    %7 = vector.broadcast %cst_5 : f32 to vector<16x256xf32>
    %8 = arith.maximumf %6, %7 : vector<16x256xf32>
    %9 = arith.truncf %8 : vector<16x256xf32> to vector<16x256xbf16>
    %c0_6 = arith.constant 0 : index
    %c0_7 = arith.constant 0 : index
    %10 = vector.load %arg4[%c0_6, %c0_7] : memref<256x128xbf16, #tpu.memory_space<vmem>>, vector<256x128xbf16>
    %cst_8 = arith.constant dense<0.000000e+00> : vector<16x128xf32>
    %11 = tpu.matmul %9, %10, %cst_8 {dimension_numbers = #tpu.dot_dimension_numbers<[1], [0], [0], [1], [0, 0, 1, 1], [], []>} : vector<16x256xbf16>, vector<256x128xbf16>, vector<16x128xf32> -> vector<16x128xf32>
    %c0_9 = arith.constant 0 : index
    %c0_10 = arith.constant 0 : index
    %12 = vector.load %arg5[%c0_9, %c0_10] : memref<1x128xf32, #tpu.memory_space<vmem>>, vector<1x128xf32>
    %13 = vector.broadcast %12 : vector<1x128xf32> to vector<16x128xf32>
    %14 = arith.addf %11, %13 : vector<16x128xf32>
    %cst_11 = arith.constant 0.000000e+00 : f32
    %15 = vector.broadcast %cst_11 : f32 to vector<16x128xf32>
    %16 = arith.maximumf %14, %15 : vector<16x128xf32>
    %c0_12 = arith.constant 0 : index
    %c0_13 = arith.constant 0 : index
    %17 = vector.load %arg6[%c0_12, %c0_13] : memref<16x128xf32, #tpu.memory_space<vmem>>, vector<16x128xf32>
    tpu.vector_store %arg6[%c0_12, %c0_13], %16 {strides = array<i32>} : memref<16x128xf32, #tpu.memory_space<vmem>>, vector<16x128xf32>,
    return
  }
  func.func @transform_0(%arg0: i32) -> (i32, i32) {
    %c0_i32 = arith.constant 0 : i32
    %c0_i32_0 = arith.constant 0 : i32
    return %arg0, %c0_i32 : i32, i32
  }
  func.func @transform_1(%arg0: i32) -> (i32, i32) {
    %c0_i32 = arith.constant 0 : i32
    %c0_i32_0 = arith.constant 0 : i32
    %c0_i32_1 = arith.constant 0 : i32
    return %c0_i32, %c0_i32_0 : i32, i32
  }
  func.func @transform_2(%arg0: i32) -> (i32, i32) {
    %c0_i32 = arith.constant 0 : i32
    %c0_i32_0 = arith.constant 0 : i32
    %c0_i32_1 = arith.constant 0 : i32
    return %c0_i32, %c0_i32_0 : i32, i32
  }
  func.func @transform_3(%arg0: i32) -> (i32, i32) {
    %c0_i32 = arith.constant 0 : i32
    %c0_i32_0 = arith.constant 0 : i32
    %c0_i32_1 = arith.constant 0 : i32
    return %c0_i32, %c0_i32_0 : i32, i32
  }
  func.func @transform_4(%arg0: i32) -> (i32, i32) {
    %c0_i32 = arith.constant 0 : i32
    %c0_i32_0 = arith.constant 0 : i32
    %c0_i32_1 = arith.constant 0 : i32
    return %c0_i32, %c0_i32_0 : i32, i32
  }
  func.func @transform_5(%arg0: i32) -> (i32, i32) {
    %c0_i32 = arith.constant 0 : i32
    %c0_i32_0 = arith.constant 0 : i32
    return %arg0, %c0_i32 : i32, i32
  }
}

module attributes {stable_mosaic.version = 11 : i64} {
  func.func @_fused_kernel(%arg0: i32, %arg1: memref<16x128xf32, #tpu.memory_space<vmem>>, %arg2: memref<128x256xbf16, #tpu.memory_space<vmem>>, %arg3: memref<1x256xf32, #tpu.memory_space<vmem>>, %arg4: memref<256x128xbf16, #tpu.memory_space<vmem>>, %arg5: memref<1x128xf32, #tpu.memory_space<vmem>>, %arg6: memref<16x128xf32, #tpu.memory_space<vmem>>) attributes {dimension_semantics = [#tpu.dimension_semantics<parallel>], iteration_bounds = array<i64: 1>, scalar_prefetch = 0 : i64, scratch_operands = 0 : i64, tpu.core_type = #tpu.core_type<tc>, window_params = [{transform_indices = @transform_0, window_bounds = array<i64: 16, 128>}, {pipeline_mode = #tpu.pipeline_mode<synchronous>, transform_indices = @transform_1, window_bounds = array<i64: 128, 256>}, {pipeline_mode = #tpu.pipeline_mode<synchronous>, transform_indices = @transform_2, window_bounds = array<i64: 1, 256>}, {pipeline_mode = #tpu.pipeline_mode<synchronous>, transform_indices = @transform_3, window_bounds = array<i64: 256, 128>}, {pipeline_mode = #tpu.pipeline_mode<synchronous>, transform_indices = @transform_4, window_bounds = array<i64: 1, 128>}, {transform_indices = @transform_5, window_bounds = array<i64: 16, 128>}]} {
    %c0 = arith.constant 0 : index
    %c0_0 = arith.constant 0 : index
    %0 = vector.load %arg1[%c0, %c0_0] : memref<16x128xf32, #tpu.memory_space<vmem>>, vector<16x128xf32>
    %1 = arith.truncf %0 : vector<16x128xf32> to vector<16x128xbf16>
    %c0_1 = arith.constant 0 : index
    %c0_2 = arith.constant 0 : index
    %2 = vector.load %arg2[%c0_1, %c0_2] : memref<128x256xbf16, #tpu.memory_space<vmem>>, vector<128x256xbf16>
    %cst = arith.constant dense<0.000000e+00> : vector<16x256xf32>
    %3 = tpu.matmul %1, %2, %cst {dimension_numbers = #tpu.dot_dimension_numbers<[1], [0], [0], [1], [0, 0, 1, 1], [], []>} : vector<16x128xbf16>, vector<128x256xbf16>, vector<16x256xf32> -> vector<16x256xf32>
    %c0_3 = arith.constant 0 : index
    %c0_4 = arith.constant 0 : index
    %4 = vector.load %arg3[%c0_3, %c0_4] : memref<1x256xf32, #tpu.memory_space<vmem>>, vector<1x256xf32>
    %5 = vector.broadcast %4 : vector<1x256xf32> to vector<16x256xf32>
    %6 = arith.addf %3, %5 : vector<16x256xf32>
    %cst_5 = arith.constant 0.000000e+00 : f32
    %7 = vector.broadcast %cst_5 : f32 to vector<16x256xf32>
    %8 = arith.maximumf %6, %7 : vector<16x256xf32>
    %9 = arith.truncf %8 : vector<16x256xf32> to vector<16x256xbf16>
    %c0_6 = arith.constant 0 : index
    %c0_7 = arith.constant 0 : index
    %10 = vector.load %arg4[%c0_6, %c0_7] : memref<256x128xbf16, #tpu.memory_space<vmem>>, vector<256x128xbf16>
    %cst_8 = arith.constant dense<0.000000e+00> : vector<16x128xf32>
    %11 = tpu.matmul %9, %10, %cst_8 {dimension_numbers = #tpu.dot_dimension_numbers<[1], [0], [0], [1], [0, 0, 1, 1], [], []>} : vector<16x256xbf16>, vector<256x128xbf16>, vector<16x128xf32> -> vector<16x128xf32>
    %c0_9 = arith.constant 0 : index
    %c0_10 = arith.constant 0 : index
    %12 = vector.load %arg5[%c0_9, %c0_10] : memref<1x128xf32, #tpu.memory_space<vmem>>, vector<1x128xf32>
    %13 = vector.broadcast %12 : vector<1x128xf32> to vector<16x128xf32>
    %14 = arith.addf %11, %13 : vector<16x128xf32>
    %cst_11 = arith.constant 0.000000e+00 : f32
    %15 = vector.broadcast %cst_11 : f32 to vector<16x128xf32>
    %16 = arith.maximumf %14, %15 : vector<16x128xf32>
    %c0_12 = arith.constant 0 : index
    %c0_13 = arith.constant 0 : index
    %17 = vector.load %arg6[%c0_12, %c0_13] : memref<16x128xf32, #tpu.memory_space<vmem>>, vector<16x128xf32>
    tpu.vector_store %arg6[%c0_12, %c0_13], %16 {strides = array<i32>} : memref<16x128xf32, #tpu.memory_space<vmem>>, vector<16x128xf32>,
    return
  }
  func.func @transform_0(%arg0: i32) -> (i32, i32) {
    %c0_i32 = arith.constant 0 : i32
    %c0_i32_0 = arith.constant 0 : i32
    return %arg0, %c0_i32 : i32, i32
  }
  func.func @transform_1(%arg0: i32) -> (i32, i32) {
    %c0_i32 = arith.constant 0 : i32
    %c0_i32_0 = arith.constant 0 : i32
    %c0_i32_1 = arith.constant 0 : i32
    return %c0_i32, %c0_i32_0 : i32, i32
  }
  func.func @transform_2(%arg0: i32) -> (i32, i32) {
    %c0_i32 = arith.constant 0 : i32
    %c0_i32_0 = arith.constant 0 : i32
    %c0_i32_1 = arith.constant 0 : i32
    return %c0_i32, %c0_i32_0 : i32, i32
  }
  func.func @transform_3(%arg0: i32) -> (i32, i32) {
    %c0_i32 = arith.constant 0 : i32
    %c0_i32_0 = arith.constant 0 : i32
    %c0_i32_1 = arith.constant 0 : i32
    return %c0_i32, %c0_i32_0 : i32, i32
  }
  func.func @transform_4(%arg0: i32) -> (i32, i32) {
    %c0_i32 = arith.constant 0 : i32
    %c0_i32_0 = arith.constant 0 : i32
    %c0_i32_1 = arith.constant 0 : i32
    return %c0_i32, %c0_i32_0 : i32, i32
  }
  func.func @transform_5(%arg0: i32) -> (i32, i32) {
    %c0_i32 = arith.constant 0 : i32
    %c0_i32_0 = arith.constant 0 : i32
    return %arg0, %c0_i32 : i32, i32
  }
}

</mosaic_0001>

<llo_original>
// kernel: tpu_custom_call.1
$region0: #{tpu_custom_call.1}
  #allocation0 [shape = 'u32[]', space=smem, size = 0x4, offset = 0x4, fixed_abs, tag = 'smem constant byte address 0x4 - core index']
  #allocation1 [shape = 'u32[144,128]{1,0:T(1,128)}', space=vmem, size = 0x12000, scoped, tag = 'internal scratch']
  %s0 = inlined_call_operand.hbm [shape: f32[16,128], index: 0, kind: input, shape index: {}]
  %s1 = inlined_call_operand.hbm [shape: bf16[128,256], index: 1, kind: input, shape index: {}]
  %s2 = inlined_call_operand.vmem [shape: f32[1,256], index: 2, kind: input, shape index: {}]
  %s3 = inlined_call_operand.hbm [shape: bf16[256,128], index: 3, kind: input, shape index: {}]
  %s4 = inlined_call_operand.vmem [shape: f32[1,128], index: 4, kind: input, shape index: {}]
  %s5 = inlined_call_operand.hbm [shape: f32[16,128], index: 5, kind: output, shape index: {}]
  %s6 = sld [smem:[#allocation0]]
  $region42: #{tpu_custom_call.1} parent=0
    _
  %s8 = ssub.s32 1, %s6
  %s9 = scalar_select 0, %s8, %s6
  $region1: #{tpu_custom_call.1} parent=0
    #allocation2 [shape = 'u8[8192]{0}', space=vmem, size = 0x2000, scoped, tag = 'input window, operand 0, single buffered']
    #allocation3 [shape = 's32[1]{0}', space=sflag, size = 0x4, scoped, tag = 'scoped memory for tpu_custom_call.1']
    #allocation4 [shape = 's32[1]{0}', space=sflag, size = 0x4, scoped, tag = 'scoped memory for tpu_custom_call.1']
    #allocation5 [shape = 'u8[65536]{0}', space=vmem, size = 0x10000, scoped, tag = 'input window, operand 1, single buffered']
    #allocation6 [shape = 's32[1]{0}', space=sflag, size = 0x4, scoped, tag = 'scoped memory for tpu_custom_call.1']
    #allocation7 [shape = 'u8[65536]{0}', space=vmem, size = 0x10000, scoped, tag = 'input window, operand 3, single buffered']
    #allocation8 [shape = 'u8[8192]{0}', space=vmem, size = 0x2000, scoped, tag = 'output window, operand 0, single buffered']
    %10 = vsyncpa [#allocation3], 0
    %11 = vsyncpa [#allocation6], 0
    %12 = vsyncpa [#allocation4], 0
    // Predicated region
    $region2: #{tpu_custom_call.1} parent=1 // pred_check
      _
    $region3: #{tpu_custom_call.1} parent=1 // pred_check_branch
      %14 = sbr.rel (0) target = $region5
    $region4: #{tpu_custom_call.1} parent=1 // pred_region
      %s16 = ssub.s32 256, 256
      %17 = vsyncadd [#allocation3], %s16
      %s18 = sshll.u32 [#allocation2], 4
      %s19 = int_to_ptr.vmem [resolvable:$true] %s18
      %24 = dma.hbm_to_vmem [thread:$0]  %s0, 256, %s19, [#allocation3], 128, 128, 8
    $region5: #{tpu_custom_call.1} parent=1 // pred_fallthru
      _
    // Predicated region
    $region6: #{tpu_custom_call.1} parent=1 // pred_check
      _
    $region7: #{tpu_custom_call.1} parent=1 // pred_check_branch
      %26 = sbr.rel (0) target = $region9
    $region8: #{tpu_custom_call.1} parent=1 // pred_region
      %s28 = ssub.s32 2048, 2048
      %29 = vsyncadd [#allocation6], %s28
      %s30 = sshll.u32 [#allocation5], 4
      %s31 = int_to_ptr.vmem [resolvable:$true] %s30
      %36 = dma.hbm_to_vmem [thread:$0]  %s1, 2048, %s31, [#allocation6], 128, 128, 8
    $region9: #{tpu_custom_call.1} parent=1 // pred_fallthru
      _
    // Predicated region
    $region10: #{tpu_custom_call.1} parent=1 // pred_check
      _
    $region11: #{tpu_custom_call.1} parent=1 // pred_check_branch
      %38 = sbr.rel (0) target = $region13
    $region12: #{tpu_custom_call.1} parent=1 // pred_region
      _
    $region13: #{tpu_custom_call.1} parent=1 // pred_fallthru
      _
    // Predicated region
    $region14: #{tpu_custom_call.1} parent=1 // pred_check
      _
    $region15: #{tpu_custom_call.1} parent=1 // pred_check_branch
      %40 = sbr.rel (0) target = $region17
    $region16: #{tpu_custom_call.1} parent=1 // pred_region
      %s42 = ssub.s32 2048, 2048
      %43 = vsyncadd [#allocation6], %s42
      %s44 = sshll.u32 [#allocation7], 4
      %s45 = int_to_ptr.vmem [resolvable:$true] %s44
      %50 = dma.hbm_to_vmem [thread:$0]  %s3, 2048, %s45, [#allocation6], 64, 64, 4
    $region17: #{tpu_custom_call.1} parent=1 // pred_fallthru
      _
    // Predicated region
    $region18: #{tpu_custom_call.1} parent=1 // pred_check
      _
    $region19: #{tpu_custom_call.1} parent=1 // pred_check_branch
      %52 = sbr.rel (0) target = $region21
    $region20: #{tpu_custom_call.1} parent=1 // pred_region
      _
    $region21: #{tpu_custom_call.1} parent=1 // pred_fallthru
      _
    // Predicated region
    $region22: #{tpu_custom_call.1} parent=1 // pred_check
      _
    $region23: #{tpu_custom_call.1} parent=1 // pred_check_branch
      %54 = sbr.rel (0) target = $region25
    $region24: #{tpu_custom_call.1} parent=1 // pred_region
      %55 = dma.done [#allocation3], 256
    $region25: #{tpu_custom_call.1} parent=1 // pred_fallthru
      _
    // Predicated region
    $region26: #{tpu_custom_call.1} parent=1 // pred_check
      _
    $region27: #{tpu_custom_call.1} parent=1 // pred_check_branch
      %57 = sbr.rel (0) target = $region29
    $region28: #{tpu_custom_call.1} parent=1 // pred_region
      %58 = dma.done [#allocation6], 2048
    $region29: #{tpu_custom_call.1} parent=1 // pred_fallthru
      _
    // Predicated region
    $region30: #{tpu_custom_call.1} parent=1 // pred_check
      _
    $region31: #{tpu_custom_call.1} parent=1 // pred_check_branch
      %60 = sbr.rel (0) target = $region33
    $region32: #{tpu_custom_call.1} parent=1 // pred_region
      %61 = dma.done [#allocation6], 2048
    $region33: #{tpu_custom_call.1} parent=1 // pred_fallthru
      _
    %v63 = vld [vmem:[#allocation2] sm:$0xff]
    %v64 = vld [vmem:[#allocation2 + $0x8] sm:$0xff]
    %v65 = vpack.c.bf16 %v64, %v63
    %v66 = vld [vmem:[#allocation5] sm:$0xff]
    %v67 = vld [vmem:[#allocation5 + $0x8] sm:$0xff]
    %v68 = vld [vmem:[#allocation5 + $0x10] sm:$0xff]
    %v69 = vld [vmem:[#allocation5 + $0x18] sm:$0xff]
    %v70 = vld [vmem:[#allocation5 + $0x20] sm:$0xff]
    %v71 = vld [vmem:[#allocation5 + $0x28] sm:$0xff]
    %v72 = vld [vmem:[#allocation5 + $0x30] sm:$0xff]
    %v73 = vld [vmem:[#allocation5 + $0x38] sm:$0xff]
    %v74 = vld [vmem:[#allocation5 + $0x40] sm:$0xff]
    %v75 = vld [vmem:[#allocation5 + $0x48] sm:$0xff]
    %v76 = vld [vmem:[#allocation5 + $0x50] sm:$0xff]
    %v77 = vld [vmem:[#allocation5 + $0x58] sm:$0xff]
    %v78 = vld [vmem:[#allocation5 + $0x60] sm:$0xff]
    %v79 = vld [vmem:[#allocation5 + $0x68] sm:$0xff]
    %v80 = vld [vmem:[#allocation5 + $0x70] sm:$0xff]
    %v81 = vld [vmem:[#allocation5 + $0x78] sm:$0xff]
    %v82 = vld [vmem:[%s2] sm:$0x3]
    %v84 = vlaneseq
    %v85 = vshrl.u32 %v84, 7
    %v86 = vsub.s32 0, %v85
    %v87 = vrot.slane %v82, %v86
    %v88 = vlaneseq
    %v89 = vshrl.u32 %v88, 7
    %v90 = vsub.s32 1, %v89
    %v91 = vrot.slane %v82, %v90
    %v110 = vunpack.c.l.b16 %v66
    %v111 = vunpack.c.h.b16 %v66
    %v112 = vunpack.c.l.b16 %v67
    %v113 = vunpack.c.h.b16 %v67
    %v114 = vunpack.c.l.b16 %v68
    %v115 = vunpack.c.h.b16 %v68
    %v116 = vunpack.c.l.b16 %v69
    %v117 = vunpack.c.h.b16 %v69
    %v118 = vunpack.c.l.b16 %v70
    %v119 = vunpack.c.h.b16 %v70
    %v120 = vunpack.c.l.b16 %v71
    %v121 = vunpack.c.h.b16 %v71
    %v122 = vunpack.c.l.b16 %v72
    %v123 = vunpack.c.h.b16 %v72
    %v124 = vunpack.c.l.b16 %v73
    %v125 = vunpack.c.h.b16 %v73
    %v126 = vunpack.c.l.b16 %v74
    %v127 = vunpack.c.h.b16 %v74
    %v128 = vunpack.c.l.b16 %v75
    %v129 = vunpack.c.h.b16 %v75
    %v130 = vunpack.c.l.b16 %v76
    %v131 = vunpack.c.h.b16 %v76
    %v132 = vunpack.c.l.b16 %v77
    %v133 = vunpack.c.h.b16 %v77
    %v134 = vunpack.c.l.b16 %v78
    %v135 = vunpack.c.h.b16 %v78
    %v136 = vunpack.c.l.b16 %v79
    %v137 = vunpack.c.h.b16 %v79
    %v138 = vunpack.c.l.b16 %v80
    %v139 = vunpack.c.h.b16 %v80
    %v140 = vunpack.c.l.b16 %v81
    %v141 = vunpack.c.h.b16 %v81
    %v142 = vpack.c.b16 %v112, %v110
    %v143 = vpack.c.b16 %v113, %v111
    %v144 = vpack.c.b16 %v116, %v114
    %v145 = vpack.c.b16 %v117, %v115
    %v146 = vpack.c.b16 %v120, %v118
    %v147 = vpack.c.b16 %v121, %v119
    %v148 = vpack.c.b16 %v124, %v122
    %v149 = vpack.c.b16 %v125, %v123
    %v150 = vpack.c.b16 %v128, %v126
    %v151 = vpack.c.b16 %v129, %v127
    %v152 = vpack.c.b16 %v132, %v130
    %v153 = vpack.c.b16 %v133, %v131
    %v154 = vpack.c.b16 %v136, %v134
    %v155 = vpack.c.b16 %v137, %v135
    %v156 = vpack.c.b16 %v140, %v138
    %v157 = vpack.c.b16 %v141, %v139
    %174 = vmatprep.subr.bf16.mxu0 %v143
    %175 = vmatpush1.bf16.msra.mxu0 %v142
    %176 = vmatprep.subr.bf16.mxu0 %v145
    %177 = vmatpush1.bf16.msra.mxu0 %v144
    %178 = vmatprep.subr.bf16.mxu0 %v147
    %179 = vmatpush1.bf16.msra.mxu0 %v146
    %180 = vmatprep.subr.bf16.mxu0 %v149
    %181 = vmatpush1.bf16.msra.mxu0 %v148
    %182 = vmatprep.subr.bf16.mxu0 %v151
    %183 = vmatpush1.bf16.msra.mxu0 %v150
    %184 = vmatprep.subr.bf16.mxu0 %v153
    %185 = vmatpush1.bf16.msra.mxu0 %v152
    %186 = vmatprep.subr.bf16.mxu0 %v155
    %187 = vmatpush1.bf16.msra.mxu0 %v154
    %188 = vmatprep.subr.bf16.mxu0 %v157
    %189 = vmatpush1.bf16.msra.mxu0 %v156
    %190 = vmatprep.subr.bf16.mxu0 0
    %191 = vmatpush1.bf16.msra.mxu0 0
    %192 = vmatprep.subr.bf16.mxu0 0
    %193 = vmatpush1.bf16.msra.mxu0 0
    %194 = vmatprep.subr.bf16.mxu0 0
    %195 = vmatpush1.bf16.msra.mxu0 0
    %196 = vmatprep.subr.bf16.mxu0 0
    %197 = vmatpush1.bf16.msra.mxu0 0
    %198 = vmatprep.subr.bf16.mxu0 0
    %199 = vmatpush1.bf16.msra.mxu0 0
    %200 = vmatprep.subr.bf16.mxu0 0
    %201 = vmatpush1.bf16.msra.mxu0 0
    %202 = vmatprep.subr.bf16.mxu0 0
    %203 = vmatpush1.bf16.msra.mxu0 0
    %204 = vmatprep.subr.bf16.mxu0 0
    %205 = vmatpush1.bf16.msra.mxu0 0
    %206 = vmatprep.mubr.bf16.mxu0 0
    %207 = vmatmul.mubr.bf16.gmra.mrb[0].mxu0 %v65
    %v208 = vpop.f32.mrb[0].mxu0
    %v209 = vadd.f32 %v87, %v208
    %v210 = vpop.f32.mrb[0].mxu0
    %v211 = vadd.f32 %v91, %v210
    %v212 = vpop.f32.mrb[0].mxu0
    %v213 = vadd.f32 %v87, %v212
    %v214 = vpop.f32.mrb[0].mxu0
    %v215 = vadd.f32 %v91, %v214
    %216 = vdwg.mxu0
    %v217 = vmax.f32 %v209, 0.0
    %v218 = vmax.f32 %v211, 0.0
    %v219 = vmax.f32 %v213, 0.0
    %v220 = vmax.f32 %v215, 0.0
    %v221 = vpack.c.bf16 %v219, %v217
    %v222 = vpack.c.bf16 %v220, %v218
    %v223 = vld [vmem:[#allocation7] sm:$0xf]
    %v224 = vld [vmem:[#allocation7 + $0x4] sm:$0xf]
    %v225 = vld [vmem:[#allocation7 + $0x8] sm:$0xf]
    %v226 = vld [vmem:[#allocation7 + $0xc] sm:$0xf]
    %v227 = vld [vmem:[#allocation7 + $0x10] sm:$0xf]
    %v228 = vld [vmem:[#allocation7 + $0x14] sm:$0xf]
    %v229 = vld [vmem:[#allocation7 + $0x18] sm:$0xf]
    %v230 = vld [vmem:[#allocation7 + $0x1c] sm:$0xf]
    %v231 = vld [vmem:[#allocation7 + $0x20] sm:$0xf]
    %v232 = vld [vmem:[#allocation7 + $0x24] sm:$0xf]
    %v233 = vld [vmem:[#allocation7 + $0x28] sm:$0xf]
    %v234 = vld [vmem:[#allocation7 + $0x2c] sm:$0xf]
    %v235 = vld [vmem:[#allocation7 + $0x30] sm:$0xf]
    %v236 = vld [vmem:[#allocation7 + $0x34] sm:$0xf]
    %v237 = vld [vmem:[#allocation7 + $0x38] sm:$0xf]
    %v238 = vld [vmem:[#allocation7 + $0x3c] sm:$0xf]
    %v239 = vld [vmem:[#allocation7 + $0x40] sm:$0xf]
    %v240 = vld [vmem:[#allocation7 + $0x44] sm:$0xf]
    %v241 = vld [vmem:[#allocation7 + $0x48] sm:$0xf]
    %v242 = vld [vmem:[#allocation7 + $0x4c] sm:$0xf]
    %v243 = vld [vmem:[#allocation7 + $0x50] sm:$0xf]
    %v244 = vld [vmem:[#allocation7 + $0x54] sm:$0xf]
    %v245 = vld [vmem:[#allocation7 + $0x58] sm:$0xf]
    %v246 = vld [vmem:[#allocation7 + $0x5c] sm:$0xf]
    %v247 = vld [vmem:[#allocation7 + $0x60] sm:$0xf]
    %v248 = vld [vmem:[#allocation7 + $0x64] sm:$0xf]
    %v249 = vld [vmem:[#allocation7 + $0x68] sm:$0xf]
    %v250 = vld [vmem:[#allocation7 + $0x6c] sm:$0xf]
    %v251 = vld [vmem:[#allocation7 + $0x70] sm:$0xf]
    %v252 = vld [vmem:[#allocation7 + $0x74] sm:$0xf]
    %v253 = vld [vmem:[#allocation7 + $0x78] sm:$0xf]
    %v254 = vld [vmem:[#allocation7 + $0x7c] sm:$0xf]
    %v255 = vld [vmem:[%s4] sm:$0x1]
    %v257 = vlaneseq
    %v258 = vshrl.u32 %v257, 7
    %v259 = vsub.s32 0, %v258
    %v260 = vrot.slane %v255, %v259
    %v294 = vunpack.c.l.b16 %v223
    %v295 = vunpack.c.l.b16 %v224
    %v296 = vunpack.c.l.b16 %v225
    %v297 = vunpack.c.l.b16 %v226
    %v298 = vunpack.c.l.b16 %v227
    %v299 = vunpack.c.l.b16 %v228
    %v300 = vunpack.c.l.b16 %v229
    %v301 = vunpack.c.l.b16 %v230
    %v302 = vunpack.c.l.b16 %v231
    %v303 = vunpack.c.l.b16 %v232
    %v304 = vunpack.c.l.b16 %v233
    %v305 = vunpack.c.l.b16 %v234
    %v306 = vunpack.c.l.b16 %v235
    %v307 = vunpack.c.l.b16 %v236
    %v308 = vunpack.c.l.b16 %v237
    %v309 = vunpack.c.l.b16 %v238
    %v310 = vunpack.c.l.b16 %v239
    %v311 = vunpack.c.l.b16 %v240
    %v312 = vunpack.c.l.b16 %v241
    %v313 = vunpack.c.l.b16 %v242
    %v314 = vunpack.c.l.b16 %v243
    %v315 = vunpack.c.l.b16 %v244
    %v316 = vunpack.c.l.b16 %v245
    %v317 = vunpack.c.l.b16 %v246
    %v318 = vunpack.c.l.b16 %v247
    %v319 = vunpack.c.l.b16 %v248
    %v320 = vunpack.c.l.b16 %v249
    %v321 = vunpack.c.l.b16 %v250
    %v322 = vunpack.c.l.b16 %v251
    %v323 = vunpack.c.l.b16 %v252
    %v324 = vunpack.c.l.b16 %v253
    %v325 = vunpack.c.l.b16 %v254
    %v326 = vpack.c.b16 %v295, %v294
    %v327 = vpack.c.b16 %v297, %v296
    %v328 = vpack.c.b16 %v299, %v298
    %v329 = vpack.c.b16 %v301, %v300
    %v330 = vpack.c.b16 %v303, %v302
    %v331 = vpack.c.b16 %v305, %v304
    %v332 = vpack.c.b16 %v307, %v306
    %v333 = vpack.c.b16 %v309, %v308
    %v334 = vpack.c.b16 %v311, %v310
    %v335 = vpack.c.b16 %v313, %v312
    %v336 = vpack.c.b16 %v315, %v314
    %v337 = vpack.c.b16 %v317, %v316
    %v338 = vpack.c.b16 %v319, %v318
    %v339 = vpack.c.b16 %v321, %v320
    %v340 = vpack.c.b16 %v323, %v322
    %v341 = vpack.c.b16 %v325, %v324
    %358 = vmatprep.subr.bf16.mxu0 0
    %359 = vmatpush1.bf16.msra.mxu0 %v326
    %360 = vmatprep.subr.bf16.mxu0 0
    %361 = vmatpush1.bf16.msra.mxu0 %v327
    %362 = vmatprep.subr.bf16.mxu0 0
    %363 = vmatpush1.bf16.msra.mxu0 %v328
    %364 = vmatprep.subr.bf16.mxu0 0
    %365 = vmatpush1.bf16.msra.mxu0 %v329
    %366 = vmatprep.subr.bf16.mxu0 0
    %367 = vmatpush1.bf16.msra.mxu0 %v330
    %368 = vmatprep.subr.bf16.mxu0 0
    %369 = vmatpush1.bf16.msra.mxu0 %v331
    %370 = vmatprep.subr.bf16.mxu0 0
    %371 = vmatpush1.bf16.msra.mxu0 %v332
    %372 = vmatprep.subr.bf16.mxu0 0
    %373 = vmatpush1.bf16.msra.mxu0 %v333
    %374 = vmatprep.subr.bf16.mxu0 0
    %375 = vmatpush1.bf16.msra.mxu0 %v334
    %376 = vmatprep.subr.bf16.mxu0 0
    %377 = vmatpush1.bf16.msra.mxu0 %v335
    %378 = vmatprep.subr.bf16.mxu0 0
    %379 = vmatpush1.bf16.msra.mxu0 %v336
    %380 = vmatprep.subr.bf16.mxu0 0
    %381 = vmatpush1.bf16.msra.mxu0 %v337
    %382 = vmatprep.subr.bf16.mxu0 0
    %383 = vmatpush1.bf16.msra.mxu0 %v338
    %384 = vmatprep.subr.bf16.mxu0 0
    %385 = vmatpush1.bf16.msra.mxu0 %v339
    %386 = vmatprep.subr.bf16.mxu0 0
    %387 = vmatpush1.bf16.msra.mxu0 %v340
    %388 = vmatprep.subr.bf16.mxu0 0
    %389 = vmatpush1.bf16.msra.mxu0 %v341
    %390 = vmatprep.mubr.bf16.mxu0 %v222
    %391 = vmatmul.mubr.bf16.gmra.mrb[0].mxu0 %v221
    %v392 = vpop.f32.mrb[0].mxu0
    %v393 = vadd.f32 %v260, %v392
    %v394 = vpop.f32.mrb[0].mxu0
    %v395 = vpop.f32.mrb[0].mxu0
    %v396 = vadd.f32 %v260, %v395
    %v397 = vpop.f32.mrb[0].mxu0
    %398 = vdwg.mxu0
    %v399 = vmax.f32 %v393, 0.0
    %v400 = vmax.f32 %v396, 0.0
    %401 = vst [vmem:[#allocation8] sm:$0xff] %v399
    %402 = vst [vmem:[#allocation8 + $0x8] sm:$0xff] %v400
    // Predicated region
    $region34: #{tpu_custom_call.1} parent=1 // pred_check
      _
    $region35: #{tpu_custom_call.1} parent=1 // pred_check_branch
      %404 = sbr.rel (0) target = $region37
    $region36: #{tpu_custom_call.1} parent=1 // pred_region
      %s406 = ssub.s32 256, 256
      %407 = vsyncadd [#allocation4], %s406
      %s408 = sshll.u32 [#allocation8], 4
      %s409 = int_to_ptr.vmem [resolvable:$true] %s408
      %414 = dma.vmem_to_hbm [thread:$0]  %s409, 256, %s5, [#allocation4], 128, 128, 8
    $region37: #{tpu_custom_call.1} parent=1 // pred_fallthru
      _
    // Predicated region
    $region38: #{tpu_custom_call.1} parent=1 // pred_check
      _
    $region39: #{tpu_custom_call.1} parent=1 // pred_check_branch
      %416 = sbr.rel (0) target = $region41
    $region40: #{tpu_custom_call.1} parent=1 // pred_region
      %417 = dma.done [#allocation4], 256
    $region41: #{tpu_custom_call.1} parent=1 // pred_fallthru
      _
    %418 = vsyncpa [#allocation3], 1
    %419 = vsyncpa [#allocation6], 1
    %420 = vsyncpa [#allocation4], 1

// kernel: tpu_custom_call.1
$region0: #{tpu_custom_call.1}
  #allocation0 [shape = 'u32[]', space=smem, size = 0x4, offset = 0x4, fixed_abs, tag = 'smem constant byte address 0x4 - core index']
  #allocation1 [shape = 'u32[144,128]{1,0:T(1,128)}', space=vmem, size = 0x12000, scoped, tag = 'internal scratch']
  %s0 = inlined_call_operand.hbm [shape: f32[16,128], index: 0, kind: input, shape index: {}]
  %s1 = inlined_call_operand.hbm [shape: bf16[128,256], index: 1, kind: input, shape index: {}]
  %s2 = inlined_call_operand.vmem [shape: f32[1,256], index: 2, kind: input, shape index: {}]
  %s3 = inlined_call_operand.hbm [shape: bf16[256,128], index: 3, kind: input, shape index: {}]
  %s4 = inlined_call_operand.vmem [shape: f32[1,128], index: 4, kind: input, shape index: {}]
  %s5 = inlined_call_operand.hbm [shape: f32[16,128], index: 5, kind: output, shape index: {}]
  %s6 = sld [smem:[#allocation0]]
  $region42: #{tpu_custom_call.1} parent=0
    _
  %s8 = ssub.s32 1, %s6
  %s9 = scalar_select 0, %s8, %s6
  $region1: #{tpu_custom_call.1} parent=0
    #allocation2 [shape = 'u8[8192]{0}', space=vmem, size = 0x2000, scoped, tag = 'input window, operand 0, single buffered']
    #allocation3 [shape = 's32[1]{0}', space=sflag, size = 0x4, scoped, tag = 'scoped memory for tpu_custom_call.1']
    #allocation4 [shape = 's32[1]{0}', space=sflag, size = 0x4, scoped, tag = 'scoped memory for tpu_custom_call.1']
    #allocation5 [shape = 'u8[65536]{0}', space=vmem, size = 0x10000, scoped, tag = 'input window, operand 1, single buffered']
    #allocation6 [shape = 's32[1]{0}', space=sflag, size = 0x4, scoped, tag = 'scoped memory for tpu_custom_call.1']
    #allocation7 [shape = 'u8[65536]{0}', space=vmem, size = 0x10000, scoped, tag = 'input window, operand 3, single buffered']
    #allocation8 [shape = 'u8[8192]{0}', space=vmem, size = 0x2000, scoped, tag = 'output window, operand 0, single buffered']
    %10 = vsyncpa [#allocation3], 0
    %11 = vsyncpa [#allocation6], 0
    %12 = vsyncpa [#allocation4], 0
    // Predicated region
    $region2: #{tpu_custom_call.1} parent=1 // pred_check
      _
    $region3: #{tpu_custom_call.1} parent=1 // pred_check_branch
      %14 = sbr.rel (0) target = $region5
    $region4: #{tpu_custom_call.1} parent=1 // pred_region
      %s16 = ssub.s32 256, 256
      %17 = vsyncadd [#allocation3], %s16
      %s18 = sshll.u32 [#allocation2], 4
      %s19 = int_to_ptr.vmem [resolvable:$true] %s18
      %24 = dma.hbm_to_vmem [thread:$0]  %s0, 256, %s19, [#allocation3], 128, 128, 8
    $region5: #{tpu_custom_call.1} parent=1 // pred_fallthru
      _
    // Predicated region
    $region6: #{tpu_custom_call.1} parent=1 // pred_check
      _
    $region7: #{tpu_custom_call.1} parent=1 // pred_check_branch
      %26 = sbr.rel (0) target = $region9
    $region8: #{tpu_custom_call.1} parent=1 // pred_region
      %s28 = ssub.s32 2048, 2048
      %29 = vsyncadd [#allocation6], %s28
      %s30 = sshll.u32 [#allocation5], 4
      %s31 = int_to_ptr.vmem [resolvable:$true] %s30
      %36 = dma.hbm_to_vmem [thread:$0]  %s1, 2048, %s31, [#allocation6], 128, 128, 8
    $region9: #{tpu_custom_call.1} parent=1 // pred_fallthru
      _
    // Predicated region
    $region10: #{tpu_custom_call.1} parent=1 // pred_check
      _
    $region11: #{tpu_custom_call.1} parent=1 // pred_check_branch
      %38 = sbr.rel (0) target = $region13
    $region12: #{tpu_custom_call.1} parent=1 // pred_region
      _
    $region13: #{tpu_custom_call.1} parent=1 // pred_fallthru
      _
    // Predicated region
    $region14: #{tpu_custom_call.1} parent=1 // pred_check
      _
    $region15: #{tpu_custom_call.1} parent=1 // pred_check_branch
      %40 = sbr.rel (0) target = $region17
    $region16: #{tpu_custom_call.1} parent=1 // pred_region
      %s42 = ssub.s32 2048, 2048
      %43 = vsyncadd [#allocation6], %s42
      %s44 = sshll.u32 [#allocation7], 4
      %s45 = int_to_ptr.vmem [resolvable:$true] %s44
      %50 = dma.hbm_to_vmem [thread:$0]  %s3, 2048, %s45, [#allocation6], 64, 64, 4
    $region17: #{tpu_custom_call.1} parent=1 // pred_fallthru
      _
    // Predicated region
    $region18: #{tpu_custom_call.1} parent=1 // pred_check
      _
    $region19: #{tpu_custom_call.1} parent=1 // pred_check_branch
      %52 = sbr.rel (0) target = $region21
    $region20: #{tpu_custom_call.1} parent=1 // pred_region
      _
    $region21: #{tpu_custom_call.1} parent=1 // pred_fallthru
      _
    // Predicated region
    $region22: #{tpu_custom_call.1} parent=1 // pred_check
      _
    $region23: #{tpu_custom_call.1} parent=1 // pred_check_branch
      %54 = sbr.rel (0) target = $region25
    $region24: #{tpu_custom_call.1} parent=1 // pred_region
      %55 = dma.done [#allocation3], 256
    $region25: #{tpu_custom_call.1} parent=1 // pred_fallthru
      _
    // Predicated region
    $region26: #{tpu_custom_call.1} parent=1 // pred_check
      _
    $region27: #{tpu_custom_call.1} parent=1 // pred_check_branch
      %57 = sbr.rel (0) target = $region29
    $region28: #{tpu_custom_call.1} parent=1 // pred_region
      %58 = dma.done [#allocation6], 2048
    $region29: #{tpu_custom_call.1} parent=1 // pred_fallthru
      _
    // Predicated region
    $region30: #{tpu_custom_call.1} parent=1 // pred_check
      _
    $region31: #{tpu_custom_call.1} parent=1 // pred_check_branch
      %60 = sbr.rel (0) target = $region33
    $region32: #{tpu_custom_call.1} parent=1 // pred_region
      %61 = dma.done [#allocation6], 2048
    $region33: #{tpu_custom_call.1} parent=1 // pred_fallthru
      _
    %v63 = vld [vmem:[#allocation2] sm:$0xff]
    %v64 = vld [vmem:[#allocation2 + $0x8] sm:$0xff]
    %v65 = vpack.c.bf16 %v64, %v63
    %v66 = vld [vmem:[#allocation5] sm:$0xff]
    %v67 = vld [vmem:[#allocation5 + $0x8] sm:$0xff]
    %v68 = vld [vmem:[#allocation5 + $0x10] sm:$0xff]
    %v69 = vld [vmem:[#allocation5 + $0x18] sm:$0xff]
    %v70 = vld [vmem:[#allocation5 + $0x20] sm:$0xff]
    %v71 = vld [vmem:[#allocation5 + $0x28] sm:$0xff]
    %v72 = vld [vmem:[#allocation5 + $0x30] sm:$0xff]
    %v73 = vld [vmem:[#allocation5 + $0x38] sm:$0xff]
    %v74 = vld [vmem:[#allocation5 + $0x40] sm:$0xff]
    %v75 = vld [vmem:[#allocation5 + $0x48] sm:$0xff]
    %v76 = vld [vmem:[#allocation5 + $0x50] sm:$0xff]
    %v77 = vld [vmem:[#allocation5 + $0x58] sm:$0xff]
    %v78 = vld [vmem:[#allocation5 + $0x60] sm:$0xff]
    %v79 = vld [vmem:[#allocation5 + $0x68] sm:$0xff]
    %v80 = vld [vmem:[#allocation5 + $0x70] sm:$0xff]
    %v81 = vld [vmem:[#allocation5 + $0x78] sm:$0xff]
    %v82 = vld [vmem:[%s2] sm:$0x3]
    %v84 = vlaneseq
    %v85 = vshrl.u32 %v84, 7
    %v86 = vsub.s32 0, %v85
    %v87 = vrot.slane %v82, %v86
    %v88 = vlaneseq
    %v89 = vshrl.u32 %v88, 7
    %v90 = vsub.s32 1, %v89
    %v91 = vrot.slane %v82, %v90
    %v110 = vunpack.c.l.b16 %v66
    %v111 = vunpack.c.h.b16 %v66
    %v112 = vunpack.c.l.b16 %v67
    %v113 = vunpack.c.h.b16 %v67
    %v114 = vunpack.c.l.b16 %v68
    %v115 = vunpack.c.h.b16 %v68
    %v116 = vunpack.c.l.b16 %v69
    %v117 = vunpack.c.h.b16 %v69
    %v118 = vunpack.c.l.b16 %v70
    %v119 = vunpack.c.h.b16 %v70
    %v120 = vunpack.c.l.b16 %v71
    %v121 = vunpack.c.h.b16 %v71
    %v122 = vunpack.c.l.b16 %v72
    %v123 = vunpack.c.h.b16 %v72
    %v124 = vunpack.c.l.b16 %v73
    %v125 = vunpack.c.h.b16 %v73
    %v126 = vunpack.c.l.b16 %v74
    %v127 = vunpack.c.h.b16 %v74
    %v128 = vunpack.c.l.b16 %v75
    %v129 = vunpack.c.h.b16 %v75
    %v130 = vunpack.c.l.b16 %v76
    %v131 = vunpack.c.h.b16 %v76
    %v132 = vunpack.c.l.b16 %v77
    %v133 = vunpack.c.h.b16 %v77
    %v134 = vunpack.c.l.b16 %v78
    %v135 = vunpack.c.h.b16 %v78
    %v136 = vunpack.c.l.b16 %v79
    %v137 = vunpack.c.h.b16 %v79
    %v138 = vunpack.c.l.b16 %v80
    %v139 = vunpack.c.h.b16 %v80
    %v140 = vunpack.c.l.b16 %v81
    %v141 = vunpack.c.h.b16 %v81
    %v142 = vpack.c.b16 %v112, %v110
    %v143 = vpack.c.b16 %v113, %v111
    %v144 = vpack.c.b16 %v116, %v114
    %v145 = vpack.c.b16 %v117, %v115
    %v146 = vpack.c.b16 %v120, %v118
    %v147 = vpack.c.b16 %v121, %v119
    %v148 = vpack.c.b16 %v124, %v122
    %v149 = vpack.c.b16 %v125, %v123
    %v150 = vpack.c.b16 %v128, %v126
    %v151 = vpack.c.b16 %v129, %v127
    %v152 = vpack.c.b16 %v132, %v130
    %v153 = vpack.c.b16 %v133, %v131
    %v154 = vpack.c.b16 %v136, %v134
    %v155 = vpack.c.b16 %v137, %v135
    %v156 = vpack.c.b16 %v140, %v138
    %v157 = vpack.c.b16 %v141, %v139
    %174 = vmatprep.subr.bf16.mxu0 %v143
    %175 = vmatpush1.bf16.msra.mxu0 %v142
    %176 = vmatprep.subr.bf16.mxu0 %v145
    %177 = vmatpush1.bf16.msra.mxu0 %v144
    %178 = vmatprep.subr.bf16.mxu0 %v147
    %179 = vmatpush1.bf16.msra.mxu0 %v146
    %180 = vmatprep.subr.bf16.mxu0 %v149
    %181 = vmatpush1.bf16.msra.mxu0 %v148
    %182 = vmatprep.subr.bf16.mxu0 %v151
    %183 = vmatpush1.bf16.msra.mxu0 %v150
    %184 = vmatprep.subr.bf16.mxu0 %v153
    %185 = vmatpush1.bf16.msra.mxu0 %v152
    %186 = vmatprep.subr.bf16.mxu0 %v155
    %187 = vmatpush1.bf16.msra.mxu0 %v154
    %188 = vmatprep.subr.bf16.mxu0 %v157
    %189 = vmatpush1.bf16.msra.mxu0 %v156
    %190 = vmatprep.subr.bf16.mxu0 0
    %191 = vmatpush1.bf16.msra.mxu0 0
    %192 = vmatprep.subr.bf16.mxu0 0
    %193 = vmatpush1.bf16.msra.mxu0 0
    %194 = vmatprep.subr.bf16.mxu0 0
    %195 = vmatpush1.bf16.msra.mxu0 0
    %196 = vmatprep.subr.bf16.mxu0 0
    %197 = vmatpush1.bf16.msra.mxu0 0
    %198 = vmatprep.subr.bf16.mxu0 0
    %199 = vmatpush1.bf16.msra.mxu0 0
    %200 = vmatprep.subr.bf16.mxu0 0
    %201 = vmatpush1.bf16.msra.mxu0 0
    %202 = vmatprep.subr.bf16.mxu0 0
    %203 = vmatpush1.bf16.msra.mxu0 0
    %204 = vmatprep.subr.bf16.mxu0 0
    %205 = vmatpush1.bf16.msra.mxu0 0
    %206 = vmatprep.mubr.bf16.mxu0 0
    %207 = vmatmul.mubr.bf16.gmra.mrb[0].mxu0 %v65
    %v208 = vpop.f32.mrb[0].mxu0
    %v209 = vadd.f32 %v87, %v208
    %v210 = vpop.f32.mrb[0].mxu0
    %v211 = vadd.f32 %v91, %v210
    %v212 = vpop.f32.mrb[0].mxu0
    %v213 = vadd.f32 %v87, %v212
    %v214 = vpop.f32.mrb[0].mxu0
    %v215 = vadd.f32 %v91, %v214
    %216 = vdwg.mxu0
    %v217 = vmax.f32 %v209, 0.0
    %v218 = vmax.f32 %v211, 0.0
    %v219 = vmax.f32 %v213, 0.0
    %v220 = vmax.f32 %v215, 0.0
    %v221 = vpack.c.bf16 %v219, %v217
    %v222 = vpack.c.bf16 %v220, %v218
    %v223 = vld [vmem:[#allocation7] sm:$0xf]
    %v224 = vld [vmem:[#allocation7 + $0x4] sm:$0xf]
    %v225 = vld [vmem:[#allocation7 + $0x8] sm:$0xf]
    %v226 = vld [vmem:[#allocation7 + $0xc] sm:$0xf]
    %v227 = vld [vmem:[#allocation7 + $0x10] sm:$0xf]
    %v228 = vld [vmem:[#allocation7 + $0x14] sm:$0xf]
    %v229 = vld [vmem:[#allocation7 + $0x18] sm:$0xf]
    %v230 = vld [vmem:[#allocation7 + $0x1c] sm:$0xf]
    %v231 = vld [vmem:[#allocation7 + $0x20] sm:$0xf]
    %v232 = vld [vmem:[#allocation7 + $0x24] sm:$0xf]
    %v233 = vld [vmem:[#allocation7 + $0x28] sm:$0xf]
    %v234 = vld [vmem:[#allocation7 + $0x2c] sm:$0xf]
    %v235 = vld [vmem:[#allocation7 + $0x30] sm:$0xf]
    %v236 = vld [vmem:[#allocation7 + $0x34] sm:$0xf]
    %v237 = vld [vmem:[#allocation7 + $0x38] sm:$0xf]
    %v238 = vld [vmem:[#allocation7 + $0x3c] sm:$0xf]
    %v239 = vld [vmem:[#allocation7 + $0x40] sm:$0xf]
    %v240 = vld [vmem:[#allocation7 + $0x44] sm:$0xf]
    %v241 = vld [vmem:[#allocation7 + $0x48] sm:$0xf]
    %v242 = vld [vmem:[#allocation7 + $0x4c] sm:$0xf]
    %v243 = vld [vmem:[#allocation7 + $0x50] sm:$0xf]
    %v244 = vld [vmem:[#allocation7 + $0x54] sm:$0xf]
    %v245 = vld [vmem:[#allocation7 + $0x58] sm:$0xf]
    %v246 = vld [vmem:[#allocation7 + $0x5c] sm:$0xf]
    %v247 = vld [vmem:[#allocation7 + $0x60] sm:$0xf]
    %v248 = vld [vmem:[#allocation7 + $0x64] sm:$0xf]
    %v249 = vld [vmem:[#allocation7 + $0x68] sm:$0xf]
    %v250 = vld [vmem:[#allocation7 + $0x6c] sm:$0xf]
    %v251 = vld [vmem:[#allocation7 + $0x70] sm:$0xf]
    %v252 = vld [vmem:[#allocation7 + $0x74] sm:$0xf]
    %v253 = vld [vmem:[#allocation7 + $0x78] sm:$0xf]
    %v254 = vld [vmem:[#allocation7 + $0x7c] sm:$0xf]
    %v255 = vld [vmem:[%s4] sm:$0x1]
    %v257 = vlaneseq
    %v258 = vshrl.u32 %v257, 7
    %v259 = vsub.s32 0, %v258
    %v260 = vrot.slane %v255, %v259
    %v294 = vunpack.c.l.b16 %v223
    %v295 = vunpack.c.l.b16 %v224
    %v296 = vunpack.c.l.b16 %v225
    %v297 = vunpack.c.l.b16 %v226
    %v298 = vunpack.c.l.b16 %v227
    %v299 = vunpack.c.l.b16 %v228
    %v300 = vunpack.c.l.b16 %v229
    %v301 = vunpack.c.l.b16 %v230
    %v302 = vunpack.c.l.b16 %v231
    %v303 = vunpack.c.l.b16 %v232
    %v304 = vunpack.c.l.b16 %v233
    %v305 = vunpack.c.l.b16 %v234
    %v306 = vunpack.c.l.b16 %v235
    %v307 = vunpack.c.l.b16 %v236
    %v308 = vunpack.c.l.b16 %v237
    %v309 = vunpack.c.l.b16 %v238
    %v310 = vunpack.c.l.b16 %v239
    %v311 = vunpack.c.l.b16 %v240
    %v312 = vunpack.c.l.b16 %v241
    %v313 = vunpack.c.l.b16 %v242
    %v314 = vunpack.c.l.b16 %v243
    %v315 = vunpack.c.l.b16 %v244
    %v316 = vunpack.c.l.b16 %v245
    %v317 = vunpack.c.l.b16 %v246
    %v318 = vunpack.c.l.b16 %v247
    %v319 = vunpack.c.l.b16 %v248
    %v320 = vunpack.c.l.b16 %v249
    %v321 = vunpack.c.l.b16 %v250
    %v322 = vunpack.c.l.b16 %v251
    %v323 = vunpack.c.l.b16 %v252
    %v324 = vunpack.c.l.b16 %v253
    %v325 = vunpack.c.l.b16 %v254
    %v326 = vpack.c.b16 %v295, %v294
    %v327 = vpack.c.b16 %v297, %v296
    %v328 = vpack.c.b16 %v299, %v298
    %v329 = vpack.c.b16 %v301, %v300
    %v330 = vpack.c.b16 %v303, %v302
    %v331 = vpack.c.b16 %v305, %v304
    %v332 = vpack.c.b16 %v307, %v306
    %v333 = vpack.c.b16 %v309, %v308
    %v334 = vpack.c.b16 %v311, %v310
    %v335 = vpack.c.b16 %v313, %v312
    %v336 = vpack.c.b16 %v315, %v314
    %v337 = vpack.c.b16 %v317, %v316
    %v338 = vpack.c.b16 %v319, %v318
    %v339 = vpack.c.b16 %v321, %v320
    %v340 = vpack.c.b16 %v323, %v322
    %v341 = vpack.c.b16 %v325, %v324
    %358 = vmatprep.subr.bf16.mxu0 0
    %359 = vmatpush1.bf16.msra.mxu0 %v326
    %360 = vmatprep.subr.bf16.mxu0 0
    %361 = vmatpush1.bf16.msra.mxu0 %v327
    %362 = vmatprep.subr.bf16.mxu0 0
    %363 = vmatpush1.bf16.msra.mxu0 %v328
    %364 = vmatprep.subr.bf16.mxu0 0
    %365 = vmatpush1.bf16.msra.mxu0 %v329
    %366 = vmatprep.subr.bf16.mxu0 0
    %367 = vmatpush1.bf16.msra.mxu0 %v330
    %368 = vmatprep.subr.bf16.mxu0 0
    %369 = vmatpush1.bf16.msra.mxu0 %v331
    %370 = vmatprep.subr.bf16.mxu0 0
    %371 = vmatpush1.bf16.msra.mxu0 %v332
    %372 = vmatprep.subr.bf16.mxu0 0
    %373 = vmatpush1.bf16.msra.mxu0 %v333
    %374 = vmatprep.subr.bf16.mxu0 0
    %375 = vmatpush1.bf16.msra.mxu0 %v334
    %376 = vmatprep.subr.bf16.mxu0 0
    %377 = vmatpush1.bf16.msra.mxu0 %v335
    %378 = vmatprep.subr.bf16.mxu0 0
    %379 = vmatpush1.bf16.msra.mxu0 %v336
    %380 = vmatprep.subr.bf16.mxu0 0
    %381 = vmatpush1.bf16.msra.mxu0 %v337
    %382 = vmatprep.subr.bf16.mxu0 0
    %383 = vmatpush1.bf16.msra.mxu0 %v338
    %384 = vmatprep.subr.bf16.mxu0 0
    %385 = vmatpush1.bf16.msra.mxu0 %v339
    %386 = vmatprep.subr.bf16.mxu0 0
    %387 = vmatpush1.bf16.msra.mxu0 %v340
    %388 = vmatprep.subr.bf16.mxu0 0
    %389 = vmatpush1.bf16.msra.mxu0 %v341
    %390 = vmatprep.mubr.bf16.mxu0 %v222
    %391 = vmatmul.mubr.bf16.gmra.mrb[0].mxu0 %v221
    %v392 = vpop.f32.mrb[0].mxu0
    %v393 = vadd.f32 %v260, %v392
    %v394 = vpop.f32.mrb[0].mxu0
    %v395 = vpop.f32.mrb[0].mxu0
    %v396 = vadd.f32 %v260, %v395
    %v397 = vpop.f32.mrb[0].mxu0
    %398 = vdwg.mxu0
    %v399 = vmax.f32 %v393, 0.0
    %v400 = vmax.f32 %v396, 0.0
    %401 = vst [vmem:[#allocation8] sm:$0xff] %v399
    %402 = vst [vmem:[#allocation8 + $0x8] sm:$0xff] %v400
    // Predicated region
    $region34: #{tpu_custom_call.1} parent=1 // pred_check
      _
    $region35: #{tpu_custom_call.1} parent=1 // pred_check_branch
      %404 = sbr.rel (0) target = $region37
    $region36: #{tpu_custom_call.1} parent=1 // pred_region
      %s406 = ssub.s32 256, 256
      %407 = vsyncadd [#allocation4], %s406
      %s408 = sshll.u32 [#allocation8], 4
      %s409 = int_to_ptr.vmem [resolvable:$true] %s408
      %414 = dma.vmem_to_hbm [thread:$0]  %s409, 256, %s5, [#allocation4], 128, 128, 8
    $region37: #{tpu_custom_call.1} parent=1 // pred_fallthru
      _
    // Predicated region
    $region38: #{tpu_custom_call.1} parent=1 // pred_check
      _
    $region39: #{tpu_custom_call.1} parent=1 // pred_check_branch
      %416 = sbr.rel (0) target = $region41
    $region40: #{tpu_custom_call.1} parent=1 // pred_region
      %417 = dma.done [#allocation4], 256
    $region41: #{tpu_custom_call.1} parent=1 // pred_fallthru
      _
    %418 = vsyncpa [#allocation3], 1
    %419 = vsyncpa [#allocation6], 1
    %420 = vsyncpa [#allocation4], 1

</llo_original>
